<compile_context>
chip_gen: v7x
topology: tpu7x:2x2x1
jax: 0.10.0
libtpu: 0.0.40
codegen_flags: <defaults>
</compile_context>

<pallas_src>
import functools

import jax
import jax.numpy as jnp
import numpy as np
from jax import lax
from jax.experimental import pallas as pl
from jax.experimental.pallas import tpu as pltpu

EPS = 1e-6
KDIM = 8   # padded quadratic-basis length: [x^2, y^2, x*y, x, y, 1, 0, 0]
NPAD = 8   # padded channel dim: [colors..., 1.0 (wsum), 0...]


def _round_up(v, m):
    return (v + m - 1) // m * m


def _cdiv(a, b):
    return (a + b - 1) // b


# ----------------------------- Pallas kernels --------------------------------
def _splat_kernel_single(gauss_ref, basis_ref, out_ref, *, eps, wsum_row):
    # gauss_ref : (1, NG, 16)  cols 0:8 quadratic coeffs, 8:16 padded colors
    # basis_ref : (1, 8, TP)   rows = [x^2, y^2, xy, x, y, 1, 0, 0]
    # out_ref   : (1, 8, TP)
    g = gauss_ref[0]
    quad = g[:, 0:KDIM]                        # [NG, 8]
    colsp = g[:, KDIM:KDIM + NPAD]             # [NG, 8]
    basis = basis_ref[0]                       # [8, TP]

    # exponent(n, p) = quad[n, :] . basis[:, p]   (MXU)
    expo = lax.dot_general(quad, basis, (((1,), (0,)), ((), ())),
                           preferred_element_type=jnp.float32)   # [NG, TP]
    w = jnp.exp(expo)                                            # EUP

    # acc[c, p] = sum_n colsp[n, c] * w[n, p]; ones column -> row C is wsum.
    acc = lax.dot_general(colsp, w, (((0,), (0,)), ((), ())),
                          preferred_element_type=jnp.float32)    # [8, TP]
    inv = pl.reciprocal(acc[wsum_row:wsum_row + 1, :] + eps, approx=True)
    out_ref[0] = acc * inv


def _splat_kernel_acc(gauss_ref, basis_ref, out_ref, acc_ref, *, eps, wsum_row):
    # Same as above but with the gaussian axis split across grid dim 2.
    gi = pl.program_id(2)

    @pl.when(gi == 0)
    def _():
        acc_ref[...] = jnp.zeros_like(acc_ref)

    g = gauss_ref[0]
    quad = g[:, 0:KDIM]
    colsp = g[:, KDIM:KDIM + NPAD]
    basis = basis_ref[0]

    expo = lax.dot_general(quad, basis, (((1,), (0,)), ((), ())),
                           preferred_element_type=jnp.float32)
    w = jnp.exp(expo)
    acc_ref[...] += lax.dot_general(colsp, w, (((0,), (0,)), ((), ())),
                                    preferred_element_type=jnp.float32)

    @pl.when(gi == pl.num_programs(2) - 1)
    def _():
        acc = acc_ref[...]
        inv = pl.reciprocal(acc[wsum_row:wsum_row + 1, :] + eps, approx=True)
        out_ref[0] = acc * inv


def splat_pallas(gauss, basis, out_dim, *, tile_pixels=2048, eps=EPS):
    """gauss: [B, NG, 16] f32, basis: [1, 8, HW] f32 -> [B, out_dim, HW] f32."""
    B, NG, P = gauss.shape
    assert P == KDIM + NPAD
    _, K, HW = basis.shape
    assert K == KDIM

    # ---- pixel tiling: pad HW, keep tiles large and lane-dense --------------
    tp = min(tile_pixels, _round_up(HW, 128))
    tp = max(128, tp - tp % 128)
    # v7x megacore: keep at least 2 parallel grid steps when possible.
    if B * _cdiv(HW, tp) < 2 and HW > 128:
        tp = max(128, _round_up(_cdiv(HW, 2), 128))
    hw_pad = tp * _cdiv(HW, tp)
    if hw_pad != HW:
        basis = jnp.pad(basis, ((0, 0), (0, 0), (0, hw_pad - HW)))

    # ---- gaussian tiling: keep the full set resident unless temps blow up ---
    temp_budget = 4 << 20                     # bytes for the [tng, tp] f32 temps
    tng = NG
    if NG * tp * 4 > temp_budget and NG % 8 == 0:
        cand = min(NG, max(32, (temp_budget // (tp * 4)) // 8 * 8))
        while cand >= 8 and NG % cand:
            cand -= 8
        if cand >= 8:
            tng = cand
    n_gsteps = NG // tng

    cost = pl.CostEstimate(
        flops=2 * B * NG * hw_pad * (KDIM + NPAD),
        transcendentals=B * NG * hw_pad,
        bytes_accessed=gauss.size * 4 + basis.size * 4 + B * NPAD * hw_pad * 4)

    vmem_bytes = (2 * tng * P * 4 + 2 * KDIM * tp * 4 + 3 * NPAD * tp * 4
                  + 4 * tng * tp * 4)
    vmem_limit = int(min(max(2 * vmem_bytes, 16 << 20), 48 << 20))

    if n_gsteps == 1:
        out = pl.pallas_call(
            functools.partial(_splat_kernel_single, eps=eps, wsum_row=out_dim),
            out_shape=jax.ShapeDtypeStruct((B, NPAD, hw_pad), jnp.float32),
            grid_spec=pltpu.PrefetchScalarGridSpec(
                num_scalar_prefetch=0,
                grid=(B, hw_pad // tp),
                in_specs=[
                    pl.BlockSpec((1, NG, P), lambda b, p: (b, 0, 0)),
                    pl.BlockSpec((1, KDIM, tp), lambda b, p: (0, 0, p)),
                ],
                out_specs=pl.BlockSpec((1, NPAD, tp), lambda b, p: (b, 0, p))),
            compiler_params=pltpu.CompilerParams(
                dimension_semantics=("parallel", "parallel"),
                vmem_limit_bytes=vmem_limit),
            cost_estimate=cost,
        )(gauss, basis)
    else:
        out = pl.pallas_call(
            functools.partial(_splat_kernel_acc, eps=eps, wsum_row=out_dim),
            out_shape=jax.ShapeDtypeStruct((B, NPAD, hw_pad), jnp.float32),
            grid_spec=pltpu.PrefetchScalarGridSpec(
                num_scalar_prefetch=0,
                grid=(B, hw_pad // tp, n_gsteps),
                in_specs=[
                    pl.BlockSpec((1, tng, P), lambda b, p, g: (b, g, 0)),
                    pl.BlockSpec((1, KDIM, tp), lambda b, p, g: (0, 0, p)),
                ],
                out_specs=pl.BlockSpec((1, NPAD, tp), lambda b, p, g: (b, 0, p)),
                scratch_shapes=[pltpu.VMEM((NPAD, tp), jnp.float32)]),
            compiler_params=pltpu.CompilerParams(
                dimension_semantics=("parallel", "parallel", "arbitrary"),
                vmem_limit_bytes=vmem_limit),
            cost_estimate=cost,
        )(gauss, basis)

    return out[:, :out_dim, :HW]


# ------------------------------ JAX glue -------------------------------------
def xy_grid(size):
    h, w = size
    aspect = h / w
    h_range = aspect ** 0.5
    w_range = 1.0 / aspect ** 0.5
    xs = jnp.linspace(-w_range, w_range, w, dtype=jnp.float32)   # [W]
    ys = jnp.linspace(-h_range, h_range, h, dtype=jnp.float32)   # [H]
    xg = jnp.broadcast_to(xs[None, :], (h, w))
    yg = jnp.broadcast_to(ys[:, None], (h, w))
    return xg, yg


class GaussianSplatting2DPallas:
    """Deterministically-initialized port of GaussianSplatting2D (pos_map_offset=False)."""

    def __init__(self, num_gaussians_per_emb, emb_dim, output_dim=3, key=None):
        assert output_dim <= NPAD - 1
        self.n = num_gaussians_per_emb
        self.emb_dim = emb_dim
        self.output_dim = output_dim
        k_w, k_b = jax.random.split(key, 2)
        out_feat = num_gaussians_per_emb * (6 + output_dim)
        # nn.Linear weight [out, in], init normal(std=0.01)
        self.W = jax.random.normal(k_w, (out_feat, emb_dim), jnp.float32) * 0.01
        bias = jax.random.normal(k_b, (num_gaussians_per_emb, 6 + output_dim),
                                 jnp.float32) * 0.01
        bias = bias.at[:, :2].set(0.0)
        bias = bias.at[:, 2:4].set(-4.0)
        self.b = bias.reshape(-1)
        # TODO(synk): pos_map_offset / grid-input / F.interpolate path not
        #             implemented (module defaults pos_map_offset=False, grid=None).

    def __call__(self, feature, size, eps=EPS):
        B, N, D = feature.shape
        C = self.output_dim
        NG = N * self.n

        # projection (glue): [B, N, n*(6+C)] -> [B, NG, 6+C]
        gs_feature = feature @ self.W.T + self.b
        gs_feature = gs_feature.reshape(B, NG, 6 + C)

        positions = gs_feature[..., 0:2]          # [B, NG, 2]
        log_scales = gs_feature[..., 2:4]
        rotations = gs_feature[..., 4]
        colors = gs_feature[..., 6:]              # [B, NG, C]
        # NOTE: the module ignores the projected opacity logit (alpha == 1),
        # so no per-element alpha multiply in the kernel.
        scales = jnp.exp(log_scales) + eps

        # covariance = (R S)(R S)^T ; cov_inv = (cov + eps I)^-1
        cos_r, sin_r = jnp.cos(rotations), jnp.sin(rotations)
        R = jnp.stack([jnp.stack([cos_r, -sin_r], axis=-1),
                       jnp.stack([sin_r, cos_r], axis=-1)], axis=-2)     # [B,NG,2,2]
        S = scales[..., None] * jnp.eye(2, dtype=jnp.float32)
        RS = jnp.einsum('bnij,bnjk->bnik', R, S)
        cov = jnp.einsum('bnij,bnkj->bnik', RS, RS)
        cov_inv = jnp.linalg.inv(cov + eps * jnp.eye(2, dtype=jnp.float32))

        # Fold -0.5 and the factor-2, then expand the quadratic form so the
        # exponent becomes a K=8 matmul against [x^2, y^2, xy, x, y, 1, 0, 0].
        px, py = positions[..., 0], positions[..., 1]
        a00 = -0.5 * cov_inv[..., 0, 0]
        a01 = -cov_inv[..., 0, 1]
        a11 = -0.5 * cov_inv[..., 1, 1]
        bx = -(2.0 * a00 * px + a01 * py)
        by = -(2.0 * a11 * py + a01 * px)
        cc = a00 * px * px + a11 * py * py + a01 * px * py
        zq = jnp.zeros_like(a00)
        quad = jnp.stack([a00, a11, a01, bx, by, cc, zq, zq], axis=-1)   # [B,NG,8]

        ones = jnp.ones((B, NG, 1), jnp.float32)
        zpad = jnp.zeros((B, NG, NPAD - C - 1), jnp.float32)
        colsp = jnp.concatenate([colors, ones, zpad], axis=-1)           # [B,NG,8]
        gauss = jnp.concatenate([quad, colsp], axis=-1).astype(jnp.float32)

        # pixel basis packed as one (1, 8, HW) array shared across the batch
        H, W = size
        HW = H * W
        xg, yg = xy_grid(size)
        x = xg.reshape(HW)
        y = yg.reshape(HW)
        basis = jnp.stack([x * x, y * y, x * y, x, y, jnp.ones_like(x),
                           jnp.zeros_like(x), jnp.zeros_like(x)],
                          axis=0)[None].astype(jnp.float32)              # [1,8,HW]

        out = splat_pallas(gauss, basis, C, eps=eps)                     # [B,C,HW]
        output = out.reshape(B, C, H, W)                                 # NCHW
        return output, gs_feature


# --------------------------- pure-JAX reference -------------------------------
def splat_reference(gauss_raw, x_flat, y_flat, eps=EPS):
    # gauss_raw layout (un-folded, matches the PyTorch math):
    # [px, py, cov_inv_00, cov_inv_01, cov_inv_11, alpha, colors...]
    px = gauss_raw[..., 0:1]
    py = gauss_raw[..., 1:2]
    c00 = gauss_raw[..., 2:3]
    c01 = gauss_raw[..., 3:4]
    c11 = gauss_raw[..., 4:5]
    alpha = gauss_raw[..., 5:6]
    colors = gauss_raw[..., 6:]
    x = x_flat[:, None, :]
    y = y_flat[:, None, :]
    dx = x - px
    dy = y - py
    w = jnp.exp(-0.5 * (c00 * dx * dx + c11 * dy * dy + 2.0 * c01 * dx * dy)) * alpha
    wsum = jnp.sum(w, axis=1)
    res = jnp.einsum('bnp,bnc->bcp', w, colors) / (wsum[:, None] + eps)
    return res


if __name__ == "__main__":
    key = jax.random.PRNGKey(0)
    k_param, k_feat = jax.random.split(key)

    B, N, D = 2, 8, 32                 # batch, seq (num embeddings), emb_dim
    n_per, C = 8, 3                    # gaussians per embedding, output channels
    H, W = 16, 16

    module = GaussianSplatting2DPallas(n_per, D, output_dim=C, key=k_param)
    feature = jax.random.normal(k_feat, (B, N, D), jnp.float32)

    output, gs_feature = module(feature, size=(H, W))
    output = jax.block_until_ready(output)

    # check against pure-JAX reference of the splatting hot path (original,
    # un-folded math with explicit alpha=1, weight-sum and exact division)
    NG = N * n_per
    gs = feature @ module.W.T + module.b
    gs = gs.reshape(B, NG, 6 + C)
    positions, log_scales = gs[..., :2], gs[..., 2:4]
    rotations, colors = gs[..., 4], gs[..., 6:]
    scales = jnp.exp(log_scales) + EPS
    cos_r, sin_r = jnp.cos(rotations), jnp.sin(rotations)
    R = jnp.stack([jnp.stack([cos_r, -sin_r], -1), jnp.stack([sin_r, cos_r], -1)], -2)
    S = scales[..., None] * jnp.eye(2, dtype=jnp.float32)
    RS = jnp.einsum('bnij,bnjk->bnik', R, S)
    cov = jnp.einsum('bnij,bnkj->bnik', RS, RS)
    cov_inv = jnp.linalg.inv(cov + EPS * jnp.eye(2, dtype=jnp.float32))
    gauss_raw = jnp.concatenate(
        [positions, cov_inv[..., 0, 0, None], cov_inv[..., 0, 1, None],
         cov_inv[..., 1, 1, None], jnp.ones((B, NG, 1), jnp.float32), colors], -1)
    xg, yg = xy_grid((H, W))
    x_flat = jnp.broadcast_to(xg.reshape(1, H * W), (B, H * W))
    y_flat = jnp.broadcast_to(yg.reshape(1, H * W), (B, H * W))
    ref = splat_reference(gauss_raw, x_flat, y_flat).reshape(B, C, H, W)

    # tolerance covers the EUP approximate reciprocal in the normalization and
    # the MXU-reassociated quadratic form.
    np.testing.assert_allclose(np.asarray(output), np.asarray(ref),
                               rtol=5e-3, atol=1e-3)
    assert output.shape == (B, C, H, W)
    assert gs_feature.shape == (B, NG, 6 + C)
    print("KERNEL_OK")
</pallas_src>

<mosaic_0001>
module attributes {stable_mosaic.version = 11 : i64} {
  func.func @_splat_kernel_single(%arg0: i32, %arg1: i32, %arg2: memref<1x64x16xf32, #tpu.memory_space<vmem>>, %arg3: memref<1x8x256xf32, #tpu.memory_space<vmem>>, %arg4: memref<1x8x256xf32, #tpu.memory_space<vmem>>) attributes {dimension_semantics = [#tpu.dimension_semantics<parallel>, #tpu.dimension_semantics<parallel>], iteration_bounds = array<i64: 2, 1>, scalar_prefetch = 0 : i64, scratch_operands = 0 : i64, tpu.core_type = #tpu.core_type<tc>, window_params = [{transform_indices = @transform_0, window_bounds = array<i64: 1, 64, 16>}, {transform_indices = @transform_1, window_bounds = array<i64: 1, 8, 256>}, {transform_indices = @transform_2, window_bounds = array<i64: 1, 8, 256>}]} {
    %c0 = arith.constant 0 : index
    %c0_0 = arith.constant 0 : index
    %c0_1 = arith.constant 0 : index
    %0 = vector.load %arg2[%c0, %c0_0, %c0_1] : memref<1x64x16xf32, #tpu.memory_space<vmem>>, vector<1x64x16xf32>
    %1 = vector.shape_cast %0 : vector<1x64x16xf32> to vector<64x16xf32>
    %2 = vector.extract_strided_slice %1 {offsets = [0, 0], sizes = [64, 8], strides = [1, 1]} : vector<64x16xf32> to vector<64x8xf32>
    %3 = vector.extract_strided_slice %1 {offsets = [0, 8], sizes = [64, 8], strides = [1, 1]} : vector<64x16xf32> to vector<64x8xf32>
    %c0_2 = arith.constant 0 : index
    %c0_3 = arith.constant 0 : index
    %c0_4 = arith.constant 0 : index
    %4 = vector.load %arg3[%c0_2, %c0_3, %c0_4] : memref<1x8x256xf32, #tpu.memory_space<vmem>>, vector<1x8x256xf32>
    %5 = vector.shape_cast %4 : vector<1x8x256xf32> to vector<8x256xf32>
    %cst = arith.constant dense<0.000000e+00> : vector<64x256xf32>
    %6 = tpu.matmul %2, %5, %cst {dimension_numbers = #tpu.dot_dimension_numbers<[1], [0], [0], [1], [0, 0, 1, 1], [], []>} : vector<64x8xf32>, vector<8x256xf32>, vector<64x256xf32> -> vector<64x256xf32>
    %7 = math.exp %6 : vector<64x256xf32>
    %cst_5 = arith.constant dense<0.000000e+00> : vector<8x256xf32>
    %8 = tpu.matmul %3, %7, %cst_5 {dimension_numbers = #tpu.dot_dimension_numbers<[0], [0], [1], [1], [0, 1, 1, 1], [], []>} : vector<64x8xf32>, vector<64x256xf32>, vector<8x256xf32> -> vector<8x256xf32>
    %9 = vector.extract_strided_slice %8 {offsets = [3, 0], sizes = [1, 256], strides = [1, 1]} : vector<8x256xf32> to vector<1x256xf32>
    %cst_6 = arith.constant 9.99999997E-7 : f32
    %10 = vector.broadcast %cst_6 : f32 to vector<1x256xf32>
    %11 = arith.addf %9, %10 : vector<1x256xf32>
    %12 = tpu.reciprocal %11 {approx = true} : vector<1x256xf32> -> vector<1x256xf32>
    %13 = vector.broadcast %12 : vector<1x256xf32> to vector<8x256xf32>
    %14 = arith.mulf %8, %13 : vector<8x256xf32>
    %c0_7 = arith.constant 0 : index
    %c0_8 = arith.constant 0 : index
    %c0_9 = arith.constant 0 : index
    %15 = vector.load %arg4[%c0_7, %c0_8, %c0_9] : memref<1x8x256xf32, #tpu.memory_space<vmem>>, vector<1x8x256xf32>
    %16 = vector.shape_cast %15 : vector<1x8x256xf32> to vector<8x256xf32>
    %17 = vector.shape_cast %14 : vector<8x256xf32> to vector<1x8x256xf32>
    tpu.vector_store %arg4[%c0_7, %c0_8, %c0_9], %17 {strides = array<i32>} : memref<1x8x256xf32, #tpu.memory_space<vmem>>, vector<1x8x256xf32>,
    return
  }
  func.func @transform_0(%arg0: i32, %arg1: i32) -> (i32, i32, i32) {
    %c0_i32 = arith.constant 0 : i32
    %c0_i32_0 = arith.constant 0 : i32
    %c0_i32_1 = arith.constant 0 : i32
    return %arg0, %c0_i32, %c0_i32_0 : i32, i32, i32
  }
  func.func @transform_1(%arg0: i32, %arg1: i32) -> (i32, i32, i32) {
    %c0_i32 = arith.constant 0 : i32
    %c0_i32_0 = arith.constant 0 : i32
    %c0_i32_1 = arith.constant 0 : i32
    return %c0_i32, %c0_i32_0, %arg1 : i32, i32, i32
  }
  func.func @transform_2(%arg0: i32, %arg1: i32) -> (i32, i32, i32) {
    %c0_i32 = arith.constant 0 : i32
    %c0_i32_0 = arith.constant 0 : i32
    return %arg0, %c0_i32, %arg1 : i32, i32, i32
  }
}

</mosaic_0001>

<llo_original>
// kernel: tpu_custom_call.1
$region0: #{tpu_custom_call.1}
  #allocation0 [shape = 'u32[]', space=smem, size = 0x4, offset = 0x4, fixed_abs, tag = 'smem constant byte address 0x4 - core index']
  #allocation1 [shape = 'u32[144,128]{1,0:T(1,128)}', space=vmem, size = 0x12000, scoped, tag = 'internal scratch']
  %s0 = inlined_call_operand.vmem [shape: f32[2,64,16], index: 0, kind: input, shape index: {}]
  %s1 = inlined_call_operand.vmem [shape: f32[1,8,256], index: 1, kind: input, shape index: {}]
  %s2 = inlined_call_operand.hbm [shape: f32[2,8,256], index: 2, kind: output, shape index: {}]
  %s3 = sld [smem:[#allocation0]]
  $region41: #{tpu_custom_call.1} parent=0
    _
  %s5 = ssub.s32 1, %s3
  %s6 = scalar_select 0, %s5, %s3
  $region1: #{tpu_custom_call.1} parent=0
    #allocation2 [shape = 'u8[16384]{0}', space=vmem, size = 0x4000, scoped, tag = 'output window, operand 0']
    #allocation3 [shape = 's32[2]{0}', space=sflag, size = 0x8, scoped, tag = 'scoped memory for tpu_custom_call.1']
    %7 = vsyncpa [#allocation3], 0
    %s8 = scalar_lea.sflag [#allocation3], 1
    %9 = vsyncpa %s8, 0
    loop: start=0, step=1, limit=4
    $region2: #{tpu_custom_call.1} parent=1 // loop_pre_header
      _
    $region3: #{tpu_custom_call.1} parent=1 // loop_header
      %s11 = sphi 0, %s15
      %p12 = scmp.ge.s32.totalorder %s11, 4
      %s18 = sphi 0, %s30
      %s19 = sphi 0, %s26
      %s20 = sphi 0, %s18
      %s21 = sphi 0, %s19
      %s22 = sphi 0, %s20
      %s23 = sphi 0, %s21
      %s33 = sphi 0, %s35
      %s36 = sphi 0, %s33
      %s37 = sphi 0, %s36
      %s53 = sphi 0, %s37
      %s59 = sphi 0, %s61
      %s62 = sphi 0, %s59
      %s63 = sphi 0, %s62
      %s79 = sphi 0, %s63
      %s87 = sphi 0, %s89
      %s90 = sphi 0, %s87
      %s91 = sphi 0, %s90
      %s107 = sphi 0, %s91
    $region4: #{tpu_custom_call.1} parent=1 // loop_header_branch
      %14 = sbr.rel (%p12) target = $region8
    $region5: #{tpu_custom_call.1} parent=1 // loop_body
      %s16 = ssub.s32 %s11, 1
      %s17 = ssub.s32 %s11, 2
      %s24 = sadd.s32 1, %s19
      %p25 = scmp.ge.s32.totalorder %s24, 1
      %s26 = scalar_select %p25, 0, %s24
      %s27 = sadd.s32 1, %s18
      %s28 = scalar_select %p25, %s27, %s18
      %p29 = scmp.ge.s32.totalorder %s28, 2
      %s30 = scalar_select %p29, 0, %s28
      %s31 = ssub.s32 %s18, %s30
      %p32 = scmp.eq.s32.totalorder %s31, 0
      %s34 = sadd.s32 %s33, 1
      %s35 = scalar_select %p32, %s33, %s34
      %p38 = pneg %p32
      %p39 = scmp.eq.s32.totalorder %s11, 1
      %p40 = por %p38, %p39
      %p41 = scmp.ne.s32.totalorder %s33, %s36
      %p42 = scmp.eq.s32.totalorder %s11, 0
      %p43 = por %p41, %p42
      %p44 = scmp.ne.s32.totalorder %s33, %s36
      %p45 = scmp.eq.s32.totalorder %s16, 1
      %p46 = por %p44, %p45
      %p47 = scmp.ne.s32.totalorder %s36, %s37
      %p48 = scmp.eq.s32.totalorder %s16, 0
      %p49 = por %p47, %p48
      %p50 = scmp.ne.s32.totalorder %s36, %s37
      %p51 = scmp.eq.s32.totalorder %s17, 1
      %p52 = por %p50, %p51
      %p54 = scmp.ne.s32.totalorder %s37, %s53
      %p55 = scmp.eq.s32.totalorder %s17, 0
      %p56 = por %p54, %p55
      %s57 = ssub.s32 %s19, %s26
      %p58 = scmp.eq.s32.totalorder %s57, 0
      %s60 = sadd.s32 %s59, 1
      %s61 = scalar_select %p58, %s59, %s60
      %p64 = pneg %p58
      %p65 = scmp.eq.s32.totalorder %s11, 1
      %p66 = por %p64, %p65
      %p67 = scmp.ne.s32.totalorder %s59, %s62
      %p68 = scmp.eq.s32.totalorder %s11, 0
      %p69 = por %p67, %p68
      %p70 = scmp.ne.s32.totalorder %s59, %s62
      %p71 = scmp.eq.s32.totalorder %s16, 1
      %p72 = por %p70, %p71
      %p73 = scmp.ne.s32.totalorder %s62, %s63
      %p74 = scmp.eq.s32.totalorder %s16, 0
      %p75 = por %p73, %p74
      %p76 = scmp.ne.s32.totalorder %s62, %s63
      %p77 = scmp.eq.s32.totalorder %s17, 1
      %p78 = por %p76, %p77
      %p80 = scmp.ne.s32.totalorder %s63, %s79
      %p81 = scmp.eq.s32.totalorder %s17, 0
      %p82 = por %p80, %p81
      %s83 = ssub.s32 %s18, %s30
      %s84 = ssub.s32 %s19, %s26
      %s85 = sor.u32 %s83, %s84
      %p86 = scmp.eq.s32.totalorder %s85, 0
      %s88 = sadd.s32 %s87, 1
      %s89 = scalar_select %p86, %s87, %s88
      %p92 = pneg %p86
      %p93 = scmp.eq.s32.totalorder %s11, 1
      %p94 = por %p92, %p93
      %p95 = scmp.ne.s32.totalorder %s87, %s90
      %p96 = scmp.eq.s32.totalorder %s11, 0
      %p97 = por %p95, %p96
      %p98 = scmp.ne.s32.totalorder %s87, %s90
      %p99 = scmp.eq.s32.totalorder %s16, 1
      %p100 = por %p98, %p99
      %p101 = scmp.ne.s32.totalorder %s90, %s91
      %p102 = scmp.eq.s32.totalorder %s16, 0
      %p103 = por %p101, %p102
      %p104 = scmp.ne.s32.totalorder %s90, %s91
      %p105 = scmp.eq.s32.totalorder %s17, 1
      %p106 = por %p104, %p105
      %p108 = scmp.ne.s32.totalorder %s91, %s107
      %p109 = scmp.eq.s32.totalorder %s17, 0
      %p110 = por %p108, %p109
      %p111 = scmp.le.s32.totalorder 1, %s11
      %p112 = scmp.lt.s32.totalorder %s11, 3
      %p113 = pnand %p111, %p112
      %p114 = pneg %p113
      // Predicated region
      $region9: #{tpu_custom_call.1} parent=5 // pred_check
        _
      $region10: #{tpu_custom_call.1} parent=5 // pred_check_branch
        %116 = sbr.rel (%p113) target = $region12
      $region11: #{tpu_custom_call.1} parent=5 // pred_region
        %s117 = ssub.s32 %s11, 1
        // Predicated region
        $region13: #{tpu_custom_call.1} parent=11 // pred_check
          %p118 = pneg %p75
        $region14: #{tpu_custom_call.1} parent=11 // pred_check_branch
          %120 = sbr.rel (%p118) target = $region16
        $region15: #{tpu_custom_call.1} parent=11 // pred_region
          %s121 = smul.u32 2, %s21
          %p122 = scmp.lt.s32.totalorder %s121, 1
          %s123 = scalar_select %p122, %s121, 1
          %s124 = smul.addr %s123, 8
          %s125 = scalar_lea.vmem %s1, %s124
          %s126 = smul.u32 2, %s21
        $region16: #{tpu_custom_call.1} parent=11 // pred_fallthru
          _
      $region12: #{tpu_custom_call.1} parent=5 // pred_fallthru
        _
      %p127 = scmp.lt.s32.totalorder %s11, 2
      // Predicated region
      $region17: #{tpu_custom_call.1} parent=5 // pred_check
        %p128 = pneg %p127
      $region18: #{tpu_custom_call.1} parent=5 // pred_check_branch
        %130 = sbr.rel (%p128) target = $region20
      $region19: #{tpu_custom_call.1} parent=5 // pred_region
        // Predicated region
        $region21: #{tpu_custom_call.1} parent=19 // pred_check
          %p131 = pneg %p43
        $region22: #{tpu_custom_call.1} parent=19 // pred_check_branch
          %133 = sbr.rel (%p131) target = $region24
        $region23: #{tpu_custom_call.1} parent=19 // pred_region
          %p134 = scmp.lt.s32.totalorder %s18, 1
          %s135 = scalar_select %p134, %s18, 1
          %s136 = smul.addr %s135, 8
          %s137 = smul.addr %s136, 8
          %s138 = scalar_lea.vmem %s0, %s137
        $region24: #{tpu_custom_call.1} parent=19 // pred_fallthru
          _
      $region20: #{tpu_custom_call.1} parent=5 // pred_fallthru
        _
      %p139 = scmp.le.s32.totalorder 1, %s11
      %p140 = scmp.lt.s32.totalorder %s11, 3
      %p141 = pnand %p139, %p140
      %p142 = pneg %p141
      // Predicated region
      $region25: #{tpu_custom_call.1} parent=5 // pred_check
        _
      $region26: #{tpu_custom_call.1} parent=5 // pred_check_branch
        %144 = sbr.rel (%p141) target = $region28
      $region27: #{tpu_custom_call.1} parent=5 // pred_region
        %s145 = ssub.s32 %s11, 1
        %p146 = scmp.lt.s32.totalorder %s20, 1
        %s147 = scalar_select %p146, %s20, 1
        %s148 = smul.addr %s147, 8
        %s149 = smul.addr %s148, 8
        %s150 = scalar_lea.vmem %s0, %s149
        %p151 = pneg %p49
        %p152 = pneg %p46
        %s153 = smul.u32 2, %s21
        %p154 = scmp.lt.s32.totalorder %s153, 1
        %s155 = scalar_select %p154, %s153, 1
        %s156 = smul.addr %s155, 8
        %s157 = scalar_lea.vmem %s1, %s156
        %p158 = pneg %p75
        %p159 = pneg %p72
        %p160 = pneg %p103
        %p161 = pneg %p100
        %s162 = sand.u32 %s90, 1
        %s163 = scalar_lea.sflag [#allocation3], %s162
        %s164 = sand.u32 %s90, 1
        %s165 = smul.addr %s164, 16
        %s166 = scalar_lea.vmem [#allocation2], %s165
        %p167 = scmp.lt.s32.totalorder %s20, 1
        %s168 = scalar_select %p167, %s20, 1
        %s169 = smul.addr %s168, 8
        %s170 = smul.addr %s169, 8
        %s171 = scalar_lea.vmem %s0, %s170
        %s172 = smul.u32 2, %s21
        %p173 = scmp.lt.s32.totalorder %s172, 1
        %s174 = scalar_select %p173, %s172, 1
        %s175 = smul.addr %s174, 8
        %s176 = scalar_lea.vmem %s1, %s175
        %s177 = smul.u32 2, %s21
        %s178 = smul.u32 2, %s21
        %v179 = vld [vmem:[%s171] sm:$0xff]
        %v180 = vld [vmem:[%s171 + $0x8] sm:$0xff]
        %v181 = vld [vmem:[%s171 + $0x10] sm:$0xff]
        %v182 = vld [vmem:[%s171 + $0x18] sm:$0xff]
        %v183 = vld [vmem:[%s171 + $0x20] sm:$0xff]
        %v184 = vld [vmem:[%s171 + $0x28] sm:$0xff]
        %v185 = vld [vmem:[%s171 + $0x30] sm:$0xff]
        %v186 = vld [vmem:[%s171 + $0x38] sm:$0xff]
        %v187 = vld [vmem:[%s176] sm:$0xff]
        %v188 = vld [vmem:[%s176 + $0x8] sm:$0xff]
        %vm189 = vcmask 64512
        %v191 = vsel %vm189, %v179, 0
        %v194 = vsel %vm189, %v180, 0
        %v197 = vsel %vm189, %v181, 0
        %v200 = vsel %vm189, %v182, 0
        %v203 = vsel %vm189, %v183, 0
        %v206 = vsel %vm189, %v184, 0
        %v209 = vsel %vm189, %v185, 0
        %v212 = vsel %vm189, %v186, 0
        %214 = vmatprep.subr.mxu0 %v188
        %215 = vmatpush1.msra.mxu0 %v187
        %216 = vmatprep.subr.mxu0 0.0
        %217 = vmatpush1.msra.mxu0 0.0
        %218 = vmatprep.subr.mxu0 0.0
        %219 = vmatpush1.msra.mxu0 0.0
        %220 = vmatprep.subr.mxu0 0.0
        %221 = vmatpush1.msra.mxu0 0.0
        %222 = vmatprep.subr.mxu0 0.0
        %223 = vmatpush1.msra.mxu0 0.0
        %224 = vmatprep.subr.mxu0 0.0
        %225 = vmatpush1.msra.mxu0 0.0
        %226 = vmatprep.subr.mxu0 0.0
        %227 = vmatpush1.msra.mxu0 0.0
        %228 = vmatprep.subr.mxu0 0.0
        %229 = vmatpush1.msra.mxu0 0.0
        %230 = vmatprep.subr.mxu0 0.0
        %231 = vmatpush1.msra.mxu0 0.0
        %232 = vmatprep.subr.mxu0 0.0
        %233 = vmatpush1.msra.mxu0 0.0
        %234 = vmatprep.subr.mxu0 0.0
        %235 = vmatpush1.msra.mxu0 0.0
        %236 = vmatprep.subr.mxu0 0.0
        %237 = vmatpush1.msra.mxu0 0.0
        %238 = vmatprep.subr.mxu0 0.0
        %239 = vmatpush1.msra.mxu0 0.0
        %240 = vmatprep.subr.mxu0 0.0
        %241 = vmatpush1.msra.mxu0 0.0
        %242 = vmatprep.subr.mxu0 0.0
        %243 = vmatpush1.msra.mxu0 0.0
        %244 = vmatprep.subr.mxu0 0.0
        %245 = vmatpush1.msra.mxu0 0.0
        %246 = vmatprep.subr.mxu0 0.0
        %247 = vmatpush1.msra.mxu0 0.0
        %248 = vmatprep.subr.mxu0 0.0
        %249 = vmatpush1.msra.mxu0 0.0
        %250 = vmatprep.subr.mxu0 0.0
        %251 = vmatpush1.msra.mxu0 0.0
        %252 = vmatprep.subr.mxu0 0.0
        %253 = vmatpush1.msra.mxu0 0.0
        %254 = vmatprep.subr.mxu0 0.0
        %255 = vmatpush1.msra.mxu0 0.0
        %256 = vmatprep.subr.mxu0 0.0
        %257 = vmatpush1.msra.mxu0 0.0
        %258 = vmatprep.subr.mxu0 0.0
        %259 = vmatpush1.msra.mxu0 0.0
        %260 = vmatprep.subr.mxu0 0.0
        %261 = vmatpush1.msra.mxu0 0.0
        %262 = vmatprep.subr.mxu0 0.0
        %263 = vmatpush1.msra.mxu0 0.0
        %264 = vmatprep.subr.mxu0 0.0
        %265 = vmatpush1.msra.mxu0 0.0
        %266 = vmatprep.subr.mxu0 0.0
        %267 = vmatpush1.msra.mxu0 0.0
        %268 = vmatprep.subr.mxu0 0.0
        %269 = vmatpush1.msra.mxu0 0.0
        %270 = vmatprep.subr.mxu0 0.0
        %271 = vmatpush1.msra.mxu0 0.0
        %272 = vmatprep.subr.mxu0 0.0
        %273 = vmatpush1.msra.mxu0 0.0
        %274 = vmatprep.subr.mxu0 0.0
        %275 = vmatpush1.msra.mxu0 0.0
        %276 = vmatprep.subr.mxu0 0.0
        %277 = vmatpush1.msra.mxu0 0.0
        %278 = vmatprep.mubr.f32.mxu0 0.0
        %279 = vmatmul.mubr.f32.gmra.mrb[0].mxu0 %v191
        %v280 = vpop.f32.mrb[0].mxu0
        %v281 = vadd.f32 0.0, %v280
        %v282 = vpop.f32.mrb[0].mxu0
        %v283 = vadd.f32 0.0, %v282
        %284 = vmatprep.mubr.f32.mxu0 0.0
        %285 = vmatmul.mubr.f32.gmra.mrb[0].mxu0 %v194
        %v286 = vpop.f32.mrb[0].mxu0
        %v287 = vadd.f32 0.0, %v286
        %v288 = vpop.f32.mrb[0].mxu0
        %v289 = vadd.f32 0.0, %v288
        %290 = vmatprep.mubr.f32.mxu0 0.0
        %291 = vmatmul.mubr.f32.gmra.mrb[0].mxu0 %v197
        %v292 = vpop.f32.mrb[0].mxu0
        %v293 = vadd.f32 0.0, %v292
        %v294 = vpop.f32.mrb[0].mxu0
        %v295 = vadd.f32 0.0, %v294
        %296 = vmatprep.mubr.f32.mxu0 0.0
        %297 = vmatmul.mubr.f32.gmra.mrb[0].mxu0 %v200
        %v298 = vpop.f32.mrb[0].mxu0
        %v299 = vadd.f32 0.0, %v298
        %v300 = vpop.f32.mrb[0].mxu0
        %v301 = vadd.f32 0.0, %v300
        %302 = vmatprep.mubr.f32.mxu0 0.0
        %303 = vmatmul.mubr.f32.gmra.mrb[0].mxu0 %v203
        %v304 = vpop.f32.mrb[0].mxu0
        %v305 = vadd.f32 0.0, %v304
        %v306 = vpop.f32.mrb[0].mxu0
        %v307 = vadd.f32 0.0, %v306
        %308 = vmatprep.mubr.f32.mxu0 0.0
        %309 = vmatmul.mubr.f32.gmra.mrb[0].mxu0 %v206
        %v310 = vpop.f32.mrb[0].mxu0
        %v311 = vadd.f32 0.0, %v310
        %v312 = vpop.f32.mrb[0].mxu0
        %v313 = vadd.f32 0.0, %v312
        %314 = vmatprep.mubr.f32.mxu0 0.0
        %315 = vmatmul.mubr.f32.gmra.mrb[0].mxu0 %v209
        %v316 = vpop.f32.mrb[0].mxu0
        %v317 = vadd.f32 0.0, %v316
        %v318 = vpop.f32.mrb[0].mxu0
        %v319 = vadd.f32 0.0, %v318
        %320 = vmatprep.mubr.f32.mxu0 0.0
        %321 = vmatmul.mubr.f32.gmra.mrb[0].mxu0 %v212
        %v322 = vpop.f32.mrb[0].mxu0
        %v323 = vadd.f32 0.0, %v322
        %v324 = vpop.f32.mrb[0].mxu0
        %v325 = vadd.f32 0.0, %v324
        %326 = vdwg.mxu0
        %v327 = vmul.f32 %v281, 1.442695
        %v328 = vpow.pop %v327
        %v329 = vmul.f32 %v283, 1.442695
        %v330 = vpow.pop %v329
        %v331 = vmul.f32 %v287, 1.442695
        %v332 = vpow.pop %v331
        %v333 = vmul.f32 %v289, 1.442695
        %v334 = vpow.pop %v333
        %v335 = vmul.f32 %v293, 1.442695
        %v336 = vpow.pop %v335
        %v337 = vmul.f32 %v295, 1.442695
        %v338 = vpow.pop %v337
        %v339 = vmul.f32 %v299, 1.442695
        %v340 = vpow.pop %v339
        %v341 = vmul.f32 %v301, 1.442695
        %v342 = vpow.pop %v341
        %v343 = vmul.f32 %v305, 1.442695
        %v344 = vpow.pop %v343
        %v345 = vmul.f32 %v307, 1.442695
        %v346 = vpow.pop %v345
        %v347 = vmul.f32 %v311, 1.442695
        %v348 = vpow.pop %v347
        %v349 = vmul.f32 %v313, 1.442695
        %v350 = vpow.pop %v349
        %v351 = vmul.f32 %v317, 1.442695
        %v352 = vpow.pop %v351
        %v353 = vmul.f32 %v319, 1.442695
        %v354 = vpow.pop %v353
        %v355 = vmul.f32 %v323, 1.442695
        %v356 = vpow.pop %v355
        %v357 = vmul.f32 %v325, 1.442695
        %v358 = vpow.pop %v357
        %359 = vrot.lane.b32.xlu0 %v179, 120
        %v360 = vpop.permute.xlu0 %359
        %361 = vrot.lane.b32.xlu0 %v180, 120
        %v362 = vpop.permute.xlu0 %361
        %363 = vrot.lane.b32.xlu0 %v181, 120
        %v364 = vpop.permute.xlu0 %363
        %365 = vrot.lane.b32.xlu0 %v182, 120
        %v366 = vpop.permute.xlu0 %365
        %367 = vrot.lane.b32.xlu0 %v183, 120
        %v368 = vpop.permute.xlu0 %367
        %369 = vrot.lane.b32.xlu0 %v184, 120
        %v370 = vpop.permute.xlu0 %369
        %371 = vrot.lane.b32.xlu0 %v185, 120
        %v372 = vpop.permute.xlu0 %371
        %373 = vrot.lane.b32.xlu0 %v186, 120
        %v374 = vpop.permute.xlu0 %373
        %383 = vxpose.xlu0.b32.start [1/16] %v360, 128
        %384 = vxpose.xlu0.b32.cont [2/16] %v362, 128
        %385 = vxpose.xlu0.b32.cont [3/16] %v364, 128
        %386 = vxpose.xlu0.b32.cont [4/16] %v366, 128
        %387 = vxpose.xlu0.b32.cont [5/16] %v368, 128
        %388 = vxpose.xlu0.b32.cont [6/16] %v370, 128
        %389 = vxpose.xlu0.b32.cont [7/16] %v372, 128
        %390 = vxpose.xlu0.b32.cont [8/16] %v374, 128
        %391 = vxpose.xlu0.b32.cont [9/16] 0.0, 128
        %392 = vxpose.xlu0.b32.cont [10/16] 0.0, 128
        %393 = vxpose.xlu0.b32.cont [11/16] 0.0, 128
        %394 = vxpose.xlu0.b32.cont [12/16] 0.0, 128
        %395 = vxpose.xlu0.b32.cont [13/16] 0.0, 128
        %396 = vxpose.xlu0.b32.cont [14/16] 0.0, 128
        %397 = vxpose.xlu0.b32.cont [15/16] 0.0, 128
        %398 = vxpose.xlu0.b32.end [16/16] 0.0, 128
        %v399 = vpop.trf.xlu0
        %v400 = vpop.trf.xlu0
        %v401 = vpop.trf.xlu0
        %v402 = vpop.trf.xlu0
        %v403 = vpop.trf.xlu0
        %v404 = vpop.trf.xlu0
        %v405 = vpop.trf.xlu0
        %v406 = vpop.trf.xlu0
        %v407 = vpop.trf.xlu0
        %v408 = vpop.trf.xlu0
        %v409 = vpop.trf.xlu0
        %v410 = vpop.trf.xlu0
        %v411 = vpop.trf.xlu0
        %v412 = vpop.trf.xlu0
        %v413 = vpop.trf.xlu0
        %v414 = vpop.trf.xlu0
        %vm415 = vcmask 523264
        %v417 = vsel %vm415, %v399, 0
        %419 = vmatprep.subr.mxu0 %v330
        %420 = vmatpush1.msra.mxu0 %v328
        %421 = vmatprep.subr.mxu0 %v334
        %422 = vmatpush1.msra.mxu0 %v332
        %423 = vmatprep.subr.mxu0 %v338
        %424 = vmatpush1.msra.mxu0 %v336
        %425 = vmatprep.subr.mxu0 %v342
        %426 = vmatpush1.msra.mxu0 %v340
        %427 = vmatprep.subr.mxu0 %v346
        %428 = vmatpush1.msra.mxu0 %v344
        %429 = vmatprep.subr.mxu0 %v350
        %430 = vmatpush1.msra.mxu0 %v348
        %431 = vmatprep.subr.mxu0 %v354
        %432 = vmatpush1.msra.mxu0 %v352
        %433 = vmatprep.subr.mxu0 %v358
        %434 = vmatpush1.msra.mxu0 %v356
        %435 = vmatprep.subr.mxu0 0.0
        %436 = vmatpush1.msra.mxu0 0.0
        %437 = vmatprep.subr.mxu0 0.0
        %438 = vmatpush1.msra.mxu0 0.0
        %439 = vmatprep.subr.mxu0 0.0
        %440 = vmatpush1.msra.mxu0 0.0
        %441 = vmatprep.subr.mxu0 0.0
        %442 = vmatpush1.msra.mxu0 0.0
        %443 = vmatprep.subr.mxu0 0.0
        %444 = vmatpush1.msra.mxu0 0.0
        %445 = vmatprep.subr.mxu0 0.0
        %446 = vmatpush1.msra.mxu0 0.0
        %447 = vmatprep.subr.mxu0 0.0
        %448 = vmatpush1.msra.mxu0 0.0
        %449 = vmatprep.subr.mxu0 0.0
        %450 = vmatpush1.msra.mxu0 0.0
        %451 = vmatprep.subr.mxu0 0.0
        %452 = vmatpush1.msra.mxu0 0.0
        %453 = vmatprep.subr.mxu0 0.0
        %454 = vmatpush1.msra.mxu0 0.0
        %455 = vmatprep.subr.mxu0 0.0
        %456 = vmatpush1.msra.mxu0 0.0
        %457 = vmatprep.subr.mxu0 0.0
        %458 = vmatpush1.msra.mxu0 0.0
        %459 = vmatprep.subr.mxu0 0.0
        %460 = vmatpush1.msra.mxu0 0.0
        %461 = vmatprep.subr.mxu0 0.0
        %462 = vmatpush1.msra.mxu0 0.0
        %463 = vmatprep.subr.mxu0 0.0
        %464 = vmatpush1.msra.mxu0 0.0
        %465 = vmatprep.subr.mxu0 0.0
        %466 = vmatpush1.msra.mxu0 0.0
        %467 = vmatprep.subr.mxu0 0.0
        %468 = vmatpush1.msra.mxu0 0.0
        %469 = vmatprep.subr.mxu0 0.0
        %470 = vmatpush1.msra.mxu0 0.0
        %471 = vmatprep.subr.mxu0 0.0
        %472 = vmatpush1.msra.mxu0 0.0
        %473 = vmatprep.subr.mxu0 0.0
        %474 = vmatpush1.msra.mxu0 0.0
        %475 = vmatprep.subr.mxu0 0.0
        %476 = vmatpush1.msra.mxu0 0.0
        %477 = vmatprep.subr.mxu0 0.0
        %478 = vmatpush1.msra.mxu0 0.0
        %479 = vmatprep.subr.mxu0 0.0
        %480 = vmatpush1.msra.mxu0 0.0
        %481 = vmatprep.subr.mxu0 0.0
        %482 = vmatpush1.msra.mxu0 0.0
        %483 = vmatprep.mubr.f32.mxu0 0.0
        %484 = vmatmul.mubr.f32.gmra.mrb[0].mxu0 %v417
        %v485 = vpop.f32.mrb[0].mxu0
        %v486 = vadd.f32 0.0, %v485
        %v487 = vpop.f32.mrb[0].mxu0
        %v488 = vadd.f32 0.0, %v487
        %489 = vdwg.mxu0
        %v490 = vadd.f32 %v486, 1e-06
        %v491 = vadd.f32 %v488, 1e-06
        %v492 = vrcp.pop %v490
        %v493 = vrcp.pop %v491
        %v494 = vlaneseq
        %v495 = vshrl.u32 %v494, 7
        %v496 = vsub.s32 3, %v495
        %v497 = vrot.slane %v492, %v496
        %v498 = vlaneseq
        %v499 = vshrl.u32 %v498, 7
        %v500 = vsub.s32 3, %v499
        %v501 = vrot.slane %v493, %v500
        %v502 = vmul.f32 %v486, %v497
        %v503 = vmul.f32 %v488, %v501
        %504 = vst [vmem:[%s166] sm:$0xff] %v502
        %505 = vst [vmem:[%s166 + $0x8] sm:$0xff] %v503
        %s506 = sand.u32 %s90, 1
        %s507 = scalar_lea.sflag [#allocation3], %s506
        %s508 = sand.u32 %s90, 1
        %s509 = smul.addr %s508, 16
        %s510 = scalar_lea.vmem [#allocation2], %s509
        // Predicated region
        $region29: #{tpu_custom_call.1} parent=27 // pred_check
          %p511 = pneg %p100
        $region30: #{tpu_custom_call.1} parent=27 // pred_check_branch
          %513 = sbr.rel (%p511) target = $region32
        $region31: #{tpu_custom_call.1} parent=27 // pred_region
          %s514 = smul.u32 2, %s21
          %s516 = ssub.s32 256, 256
          %517 = vsyncadd %s507, %s516
          %s518 = smul.addr %s20, 2
          %s519 = sadd.s32 %s514, %s518
          %s520 = smul.addr %s519, 128
          %s521 = scalar_lea.hbm %s2, %s520
          %s523 = sshll.u32 %s510, 4
          %s524 = int_to_ptr.vmem [resolvable:$true] %s523
          %526 = dma.vmem_to_hbm [thread:$0]  %s524, 256, %s521, %s507
        $region32: #{tpu_custom_call.1} parent=27 // pred_fallthru
          _
      $region28: #{tpu_custom_call.1} parent=5 // pred_fallthru
        _
      %p527 = scmp.le.s32.totalorder 2, %s11
      // Predicated region
      $region33: #{tpu_custom_call.1} parent=5 // pred_check
        %p528 = pneg %p527
      $region34: #{tpu_custom_call.1} parent=5 // pred_check_branch
        %530 = sbr.rel (%p528) target = $region36
      $region35: #{tpu_custom_call.1} parent=5 // pred_region
        %s531 = ssub.s32 %s11, 2
        // Predicated region
        $region37: #{tpu_custom_call.1} parent=35 // pred_check
          %p532 = pneg %p106
        $region38: #{tpu_custom_call.1} parent=35 // pred_check_branch
          %534 = sbr.rel (%p532) target = $region40
        $region39: #{tpu_custom_call.1} parent=35 // pred_region
          %s535 = sand.u32 %s91, 1
          %s536 = scalar_lea.sflag [#allocation3], %s535
          %s537 = sand.u32 %s91, 1
          %s538 = smul.addr %s537, 16
          %s539 = scalar_lea.vmem [#allocation2], %s538
          %540 = dma.done %s536, 256
        $region40: #{tpu_custom_call.1} parent=35 // pred_fallthru
          _
      $region36: #{tpu_custom_call.1} parent=5 // pred_fallthru
        _
    $region6: #{tpu_custom_call.1} parent=1 // loop_footer
      %s15 = sadd.s32 1, %s11
    $region7: #{tpu_custom_call.1} parent=1 // loop_footer_branch
      %10 = sbr.rel target = $region3
    $region8: #{tpu_custom_call.1} parent=1 // loop_exit
      _
    %541 = vsyncpa [#allocation3], 1
    %s542 = scalar_lea.sflag [#allocation3], 1
    %543 = vsyncpa %s542, 1

</llo_original>
